<compile_context>
chip_gen: v6e
topology: v6e:2x2x1
jax: 0.10.0
libtpu: 0.0.40
codegen_flags: <defaults>
</compile_context>

<pallas_src>
import math

import numpy as np

import jax
import jax.numpy as jnp
from jax.experimental import pallas as pl
from jax.experimental.pallas import tpu as pltpu


def _round_up(x, m):
    return ((x + m - 1) // m) * m


def _cross_attn_kernel(pos_ref, feat_ref, wq_ref, wkv_ref, b3_ref,
                       rse_ref, msum_ref, pexp_ref, woe_ref, bfin_ref,
                       out_ref):
    f32 = jnp.float32
    pos = pos_ref[...]            # (Bt, Lq*E)
    feat = feat_ref[...]          # (Bt, Lk*E)

    # Fused (external Linear + MHA in_proj [+ scale]) projections, expanded to the
    # per-(head, query, key, channel) "t" axis.  All M = Bt matmuls.
    qx = jnp.dot(pos, wq_ref[...], preferred_element_type=f32) + b3_ref[0:1, :]   # (Bt, T)
    kx = jnp.dot(feat, wkv_ref[0], preferred_element_type=f32) + b3_ref[1:2, :]   # (Bt, T)
    vx = jnp.dot(feat, wkv_ref[1], preferred_element_type=f32) + b3_ref[2:3, :]   # (Bt, T)

    # scores[b, (h,i,j)] = sum_e qx*kx  — segment-sum over e via constant 0/1 matrix.
    scores = jnp.dot(qx * kx, rse_ref[...], preferred_element_type=f32)           # (Bt, S)

    # Softmax over j within each (h, i) group.  A per-row global max is a valid
    # stabilizing shift (constant in j).
    m = jnp.max(scores, axis=-1, keepdims=True)
    p = jnp.exp(scores - m)
    denom = jnp.dot(p, msum_ref[...], preferred_element_type=f32)                 # group-sum, broadcast
    pn = p * pl.reciprocal(denom, approx=True)

    # Broadcast probs over the hd lanes, weight the values, and apply the fused
    # (MHA out_proj + final out_projection) in one contraction.
    px = jnp.dot(pn, pexp_ref[...], preferred_element_type=f32)                   # (Bt, T)
    out = jnp.dot(px * vx, woe_ref[...], preferred_element_type=f32) + bfin_ref[...]
    out_ref[...] = out                                                            # (Bt, d_query)


def make_params(key, d_query, d_key, d_value, embedding_size=8, n_heads=1):
    """Deterministic synthetic parameters with the same shapes as the PyTorch module."""
    E = embedding_size
    assert d_query % E == 0 and d_value % E == 0 and E % n_heads == 0
    assert d_key == d_value, "view(B, Lk, E) of features requires d_key == d_value"

    def linear(k, out_dim, in_dim):
        bound = 1.0 / math.sqrt(in_dim)
        kw, kb = jax.random.split(k)
        w = jax.random.uniform(kw, (out_dim, in_dim), jnp.float32, -bound, bound)
        b = jax.random.uniform(kb, (out_dim,), jnp.float32, -bound, bound)
        return w, b

    ks = jax.random.split(key, 6)
    wqp, bqp = linear(ks[0], E, E)
    wkp, bkp = linear(ks[1], E, E)
    wvp, bvp = linear(ks[2], E, E)
    w_in, b_in = linear(ks[3], 3 * E, E)        # MHA packed in_proj
    wo_attn, bo_attn = linear(ks[4], E, E)      # MHA out_proj
    wout, bout = linear(ks[5], d_query, d_value)  # final out_projection
    return dict(wqp=wqp, bqp=bqp, wkp=wkp, bkp=bkp, wvp=wvp, bvp=bvp,
                w_in=w_in, b_in=b_in, wo_attn=wo_attn, bo_attn=bo_attn,
                wout=wout, bout=bout)


def _fuse_params(params, *, d_query, d_key, embedding_size, n_heads):
    """Trace-time fusion: collapse affine chains and build constant structure matrices."""
    E = embedding_size
    H = n_heads
    hd = E // H
    Lq = d_query // E
    Lk = d_key // E
    S = H * Lq * Lk                      # one score per (head, query pos, key pos)
    T = S * hd                           # expanded axis: (head, i, j, channel-in-head)
    scale = 1.0 / math.sqrt(hd)

    w_in, b_in = params["w_in"], params["b_in"]
    Wq_in, Wk_in, Wv_in = w_in[:E], w_in[E:2 * E], w_in[2 * E:]
    bq_in, bk_in, bv_in = b_in[:E], b_in[E:2 * E], b_in[2 * E:]

    # Fold external Linear -> MHA in_proj (and 1/sqrt(hd) into Q).
    Wq_tok = scale * (Wq_in @ params["wqp"])                  # (E, E)  [out_ch, in_ch]
    bq_tok = scale * (Wq_in @ params["bqp"] + bq_in)
    Wk_tok = Wk_in @ params["wkp"]
    bk_tok = Wk_in @ params["bkp"] + bk_in
    Wv_tok = Wv_in @ params["wvp"]
    bv_tok = Wv_in @ params["bvp"] + bv_in

    # Decode the expanded axis: t = ((h*Lq + i)*Lk + j)*hd + e.
    t_idx = np.arange(T)
    e_t = t_idx % hd
    s_t = t_idx // hd
    j_t = s_t % Lk
    hi_t = s_t // Lk
    i_t = hi_t % Lq
    h_t = hi_t // Lq
    c_t = h_t * hd + e_t                 # channel within the embedding axis

    def onehot(idx, n):
        return (idx[:, None] == np.arange(n)[None, :]).astype(np.float32)

    Oi = jnp.asarray(onehot(i_t, Lq))            # (T, Lq)
    Oj = jnp.asarray(onehot(j_t, Lk))            # (T, Lk)
    R_sum_e = jnp.asarray(onehot(s_t, S))        # (T, S): sum over e within (h,i,j)
    P_exp = R_sum_e.T                            # (S, T): broadcast prob over hd lanes
    grp = np.arange(S) // Lk
    Msum = jnp.asarray((grp[:, None] == grp[None, :]).astype(np.float32))  # (S, S) group-sum+bcast

    # Expanded projection weights (row index r = token*E + input_channel).
    Wq_exp = jnp.einsum("ti,tc->ict", Oi, Wq_tok[c_t, :]).reshape(Lq * E, T)
    Wk_exp = jnp.einsum("tj,tc->jct", Oj, Wk_tok[c_t, :]).reshape(Lk * E, T)
    Wv_exp = jnp.einsum("tj,tc->jct", Oj, Wv_tok[c_t, :]).reshape(Lk * E, T)
    b_qkv = jnp.stack([bq_tok[c_t], bk_tok[c_t], bv_tok[c_t]])   # (3, T)
    Wkv_exp = jnp.stack([Wk_exp, Wv_exp])                        # (2, Lk*E, T)

    # Fold MHA out_proj + final out_projection into a single (T, d_query) matrix.
    wout_r = params["wout"].reshape(d_query, Lq, E)
    m_stack = jnp.einsum("xc,dix->icd", params["wo_attn"], wout_r)   # (Lq, E, d_query)
    W_oexp = m_stack[i_t, c_t, :]                                    # (T, d_query)
    b_fin = params["bout"] + jnp.einsum("x,dix->d", params["bo_attn"], wout_r)

    return dict(Wq_exp=Wq_exp, Wkv_exp=Wkv_exp, b_qkv=b_qkv,
                R_sum_e=R_sum_e, Msum=Msum, P_exp=P_exp,
                W_oexp=W_oexp, b_fin=b_fin.reshape(1, d_query),
                dims=(Lq, Lk, S, T))


def cross_attention_modulation(position, features, params, *, embedding_size, n_heads,
                               block_b=128):
    B = position.shape[0]
    d_query = position.shape[-1]
    d_key = features.shape[-1]
    E = embedding_size
    assert d_query % E == 0 and d_key % E == 0 and E % n_heads == 0
    assert d_key == d_query, "out_projection Linear(d_value, d_query) requires d_value == d_query"

    fused = _fuse_params(params, d_query=d_query, d_key=d_key,
                         embedding_size=E, n_heads=n_heads)
    Lq, Lk, S, T = fused["dims"]

    pos_flat = position.reshape(B, d_query).astype(jnp.float32)
    feat_flat = features.reshape(B, d_key).astype(jnp.float32)

    # Batch tiling: batch lives in the row/sublane axis of every matmul.
    bt = min(block_b, _round_up(B, 8))
    B_pad = _round_up(B, bt)
    if B_pad != B:
        pad = ((0, B_pad - B), (0, 0))
        pos_flat = jnp.pad(pos_flat, pad)
        feat_flat = jnp.pad(feat_flat, pad)

    const2 = lambda b: (0, 0)
    const3 = lambda b: (0, 0, 0)
    in_specs = [
        pl.BlockSpec((bt, d_query), lambda b: (b, 0)),        # positions (queries)
        pl.BlockSpec((bt, d_key), lambda b: (b, 0)),          # features (keys/values)
        pl.BlockSpec((Lq * E, T), const2),                    # fused+expanded Q weight
        pl.BlockSpec((2, Lk * E, T), const3),                 # fused+expanded K,V weights
        pl.BlockSpec((3, T), const2),                         # fused Q/K/V biases
        pl.BlockSpec((T, S), const2),                         # segment-sum over e
        pl.BlockSpec((S, S), const2),                         # softmax group sum+broadcast
        pl.BlockSpec((S, T), const2),                         # prob broadcast over hd
        pl.BlockSpec((T, d_query), const2),                   # fused out_proj + out_projection
        pl.BlockSpec((1, d_query), const2),                   # fused output bias
    ]
    out_specs = pl.BlockSpec((bt, d_query), lambda b: (b, 0))

    out = pl.pallas_call(
        _cross_attn_kernel,
        out_shape=jax.ShapeDtypeStruct((B_pad, d_query), jnp.float32),
        grid=(B_pad // bt,),
        in_specs=in_specs,
        out_specs=out_specs,
        compiler_params=pltpu.CompilerParams(dimension_semantics=("parallel",)),
    )(pos_flat, feat_flat, fused["Wq_exp"], fused["Wkv_exp"], fused["b_qkv"],
      fused["R_sum_e"], fused["Msum"], fused["P_exp"], fused["W_oexp"], fused["b_fin"])

    return out[:B].reshape(B, 1, d_query)


def reference_forward(position, features, params, *, embedding_size, n_heads):
    """Pure-JAX reference matching the PyTorch forward (eval mode)."""
    E = embedding_size
    H = n_heads
    hd = E // H
    B, _, d_query = position.shape
    d_key = features.shape[-1]
    Lq, Lk = d_query // E, d_key // E

    def lin(x, w, b):
        return x @ w.T + b

    q = position.reshape(B, Lq, E)
    kv = features.reshape(B, Lk, E)
    q = lin(q, params["wqp"], params["bqp"])
    k = lin(kv, params["wkp"], params["bkp"])
    v = lin(kv, params["wvp"], params["bvp"])

    w_in, b_in = params["w_in"], params["b_in"]
    qa = lin(q, w_in[:E], b_in[:E])
    ka = lin(k, w_in[E:2 * E], b_in[E:2 * E])
    va = lin(v, w_in[2 * E:], b_in[2 * E:])

    qa = qa.reshape(B, Lq, H, hd).transpose(0, 2, 1, 3)
    ka = ka.reshape(B, Lk, H, hd).transpose(0, 2, 1, 3)
    va = va.reshape(B, Lk, H, hd).transpose(0, 2, 1, 3)
    scores = (qa / math.sqrt(hd)) @ jnp.swapaxes(ka, -1, -2)
    probs = jax.nn.softmax(scores, axis=-1)
    o = probs @ va
    o = o.transpose(0, 2, 1, 3).reshape(B, Lq, E)
    o = lin(o, params["wo_attn"], params["bo_attn"])
    flat = o.reshape(B, 1, Lq * E)
    return lin(flat, params["wout"], params["bout"])


if __name__ == "__main__":
    embedding_size = 8
    d_query = d_key = d_value = 32   # seq_len_query = seq_len_features = 4

    key = jax.random.PRNGKey(0)
    for B, n_heads in [(2, 1), (256, 2)]:   # small case + batched multi-head case
        key, k_pos, k_feat, k_par = jax.random.split(key, 4)
        position = jax.random.normal(k_pos, (B, 1, d_query), jnp.float32)
        features = jax.random.normal(k_feat, (B, 1, d_key), jnp.float32)
        params = make_params(k_par, d_query, d_key, d_value,
                             embedding_size=embedding_size, n_heads=n_heads)

        out = cross_attention_modulation(position, features, params,
                                         embedding_size=embedding_size, n_heads=n_heads)
        out = jax.block_until_ready(out)

        ref = reference_forward(position, features, params,
                                embedding_size=embedding_size, n_heads=n_heads)
        assert out.shape == (B, 1, d_query)
        err = float(jnp.max(jnp.abs(out - ref)))
        assert jnp.allclose(out, ref, rtol=1e-3, atol=1e-3), (
            f"max abs err {err} (B={B}, H={n_heads})")

    print("KERNEL_OK")
</pallas_src>

<mosaic_0001>
module attributes {stable_mosaic.version = 11 : i64} {
  func.func @_cross_attn_kernel(%arg0: i32, %arg1: memref<8x32xf32, #tpu.memory_space<vmem>>, %arg2: memref<8x32xf32, #tpu.memory_space<vmem>>, %arg3: memref<32x128xf32, #tpu.memory_space<vmem>>, %arg4: memref<2x32x128xf32, #tpu.memory_space<vmem>>, %arg5: memref<3x128xf32, #tpu.memory_space<vmem>>, %arg6: memref<128x16xf32, #tpu.memory_space<vmem>>, %arg7: memref<16x16xf32, #tpu.memory_space<vmem>>, %arg8: memref<16x128xf32, #tpu.memory_space<vmem>>, %arg9: memref<128x32xf32, #tpu.memory_space<vmem>>, %arg10: memref<1x32xf32, #tpu.memory_space<vmem>>, %arg11: memref<8x32xf32, #tpu.memory_space<vmem>>) attributes {dimension_semantics = [#tpu.dimension_semantics<parallel>], iteration_bounds = array<i64: 1>, scalar_prefetch = 0 : i64, scratch_operands = 0 : i64, tpu.core_type = #tpu.core_type<tc>, window_params = [{transform_indices = @transform_0, window_bounds = array<i64: 8, 32>}, {transform_indices = @transform_1, window_bounds = array<i64: 8, 32>}, {pipeline_mode = #tpu.pipeline_mode<synchronous>, transform_indices = @transform_2, window_bounds = array<i64: 32, 128>}, {pipeline_mode = #tpu.pipeline_mode<synchronous>, transform_indices = @transform_3, window_bounds = array<i64: 2, 32, 128>}, {pipeline_mode = #tpu.pipeline_mode<synchronous>, transform_indices = @transform_4, window_bounds = array<i64: 3, 128>}, {pipeline_mode = #tpu.pipeline_mode<synchronous>, transform_indices = @transform_5, window_bounds = array<i64: 128, 16>}, {pipeline_mode = #tpu.pipeline_mode<synchronous>, transform_indices = @transform_6, window_bounds = array<i64: 16, 16>}, {pipeline_mode = #tpu.pipeline_mode<synchronous>, transform_indices = @transform_7, window_bounds = array<i64: 16, 128>}, {pipeline_mode = #tpu.pipeline_mode<synchronous>, transform_indices = @transform_8, window_bounds = array<i64: 128, 32>}, {pipeline_mode = #tpu.pipeline_mode<synchronous>, transform_indices = @transform_9, window_bounds = array<i64: 1, 32>}, {transform_indices = @transform_10, window_bounds = array<i64: 8, 32>}]} {
    %c0 = arith.constant 0 : index
    %c0_0 = arith.constant 0 : index
    %0 = vector.load %arg1[%c0, %c0_0] : memref<8x32xf32, #tpu.memory_space<vmem>>, vector<8x32xf32>
    %c0_1 = arith.constant 0 : index
    %c0_2 = arith.constant 0 : index
    %1 = vector.load %arg2[%c0_1, %c0_2] : memref<8x32xf32, #tpu.memory_space<vmem>>, vector<8x32xf32>
    %c0_3 = arith.constant 0 : index
    %c0_4 = arith.constant 0 : index
    %2 = vector.load %arg3[%c0_3, %c0_4] : memref<32x128xf32, #tpu.memory_space<vmem>>, vector<32x128xf32>
    %cst = arith.constant dense<0.000000e+00> : vector<8x128xf32>
    %3 = tpu.matmul %0, %2, %cst {dimension_numbers = #tpu.dot_dimension_numbers<[1], [0], [0], [1], [0, 0, 1, 1], [], []>} : vector<8x32xf32>, vector<32x128xf32>, vector<8x128xf32> -> vector<8x128xf32>
    %c0_5 = arith.constant 0 : index
    %c0_6 = arith.constant 0 : index
    %4 = vector.load %arg5[%c0_5, %c0_6] : memref<3x128xf32, #tpu.memory_space<vmem>>, vector<1x128xf32>
    %5 = vector.broadcast %4 : vector<1x128xf32> to vector<8x128xf32>
    %6 = arith.addf %3, %5 : vector<8x128xf32>
    %c0_7 = arith.constant 0 : index
    %c0_8 = arith.constant 0 : index
    %c0_9 = arith.constant 0 : index
    %7 = vector.load %arg4[%c0_7, %c0_8, %c0_9] : memref<2x32x128xf32, #tpu.memory_space<vmem>>, vector<1x32x128xf32>
    %8 = vector.shape_cast %7 : vector<1x32x128xf32> to vector<32x128xf32>
    %cst_10 = arith.constant dense<0.000000e+00> : vector<8x128xf32>
    %9 = tpu.matmul %1, %8, %cst_10 {dimension_numbers = #tpu.dot_dimension_numbers<[1], [0], [0], [1], [0, 0, 1, 1], [], []>} : vector<8x32xf32>, vector<32x128xf32>, vector<8x128xf32> -> vector<8x128xf32>
    %c1 = arith.constant 1 : index
    %c0_11 = arith.constant 0 : index
    %10 = vector.load %arg5[%c1, %c0_11] : memref<3x128xf32, #tpu.memory_space<vmem>>, vector<1x128xf32>
    %11 = vector.broadcast %10 : vector<1x128xf32> to vector<8x128xf32>
    %12 = arith.addf %9, %11 : vector<8x128xf32>
    %c1_12 = arith.constant 1 : index
    %c0_13 = arith.constant 0 : index
    %c0_14 = arith.constant 0 : index
    %13 = vector.load %arg4[%c1_12, %c0_13, %c0_14] : memref<2x32x128xf32, #tpu.memory_space<vmem>>, vector<1x32x128xf32>
    %14 = vector.shape_cast %13 : vector<1x32x128xf32> to vector<32x128xf32>
    %cst_15 = arith.constant dense<0.000000e+00> : vector<8x128xf32>
    %15 = tpu.matmul %1, %14, %cst_15 {dimension_numbers = #tpu.dot_dimension_numbers<[1], [0], [0], [1], [0, 0, 1, 1], [], []>} : vector<8x32xf32>, vector<32x128xf32>, vector<8x128xf32> -> vector<8x128xf32>
    %c2 = arith.constant 2 : index
    %c0_16 = arith.constant 0 : index
    %16 = vector.load %arg5[%c2, %c0_16] : memref<3x128xf32, #tpu.memory_space<vmem>>, vector<1x128xf32>
    %17 = vector.broadcast %16 : vector<1x128xf32> to vector<8x128xf32>
    %18 = arith.addf %15, %17 : vector<8x128xf32>
    %19 = arith.mulf %6, %12 : vector<8x128xf32>
    %c0_17 = arith.constant 0 : index
    %c0_18 = arith.constant 0 : index
    %20 = vector.load %arg6[%c0_17, %c0_18] : memref<128x16xf32, #tpu.memory_space<vmem>>, vector<128x16xf32>
    %cst_19 = arith.constant dense<0.000000e+00> : vector<8x16xf32>
    %21 = tpu.matmul %19, %20, %cst_19 {dimension_numbers = #tpu.dot_dimension_numbers<[1], [0], [0], [1], [0, 0, 1, 1], [], []>} : vector<8x128xf32>, vector<128x16xf32>, vector<8x16xf32> -> vector<8x16xf32>
    %cst_20 = arith.constant dense<0xFF800000> : vector<8xf32>
    %22 = vector.multi_reduction <maximumf>, %21, %cst_20 [1] : vector<8x16xf32> to vector<8xf32>
    %23 = vector.shape_cast %22 : vector<8xf32> to vector<8x1xf32>
    %24 = vector.broadcast %23 : vector<8x1xf32> to vector<8x16xf32>
    %25 = arith.subf %21, %24 : vector<8x16xf32>
    %26 = math.exp %25 : vector<8x16xf32>
    %c0_21 = arith.constant 0 : index
    %c0_22 = arith.constant 0 : index
    %27 = vector.load %arg7[%c0_21, %c0_22] : memref<16x16xf32, #tpu.memory_space<vmem>>, vector<16x16xf32>
    %cst_23 = arith.constant dense<0.000000e+00> : vector<8x16xf32>
    %28 = tpu.matmul %26, %27, %cst_23 {dimension_numbers = #tpu.dot_dimension_numbers<[1], [0], [0], [1], [0, 0, 1, 1], [], []>} : vector<8x16xf32>, vector<16x16xf32>, vector<8x16xf32> -> vector<8x16xf32>
    %29 = tpu.reciprocal %28 {approx = true} : vector<8x16xf32> -> vector<8x16xf32>
    %30 = arith.mulf %26, %29 : vector<8x16xf32>
    %c0_24 = arith.constant 0 : index
    %c0_25 = arith.constant 0 : index
    %31 = vector.load %arg8[%c0_24, %c0_25] : memref<16x128xf32, #tpu.memory_space<vmem>>, vector<16x128xf32>
    %cst_26 = arith.constant dense<0.000000e+00> : vector<8x128xf32>
    %32 = tpu.matmul %30, %31, %cst_26 {dimension_numbers = #tpu.dot_dimension_numbers<[1], [0], [0], [1], [0, 0, 1, 1], [], []>} : vector<8x16xf32>, vector<16x128xf32>, vector<8x128xf32> -> vector<8x128xf32>
    %33 = arith.mulf %32, %18 : vector<8x128xf32>
    %c0_27 = arith.constant 0 : index
    %c0_28 = arith.constant 0 : index
    %34 = vector.load %arg9[%c0_27, %c0_28] : memref<128x32xf32, #tpu.memory_space<vmem>>, vector<128x32xf32>
    %cst_29 = arith.constant dense<0.000000e+00> : vector<8x32xf32>
    %35 = tpu.matmul %33, %34, %cst_29 {dimension_numbers = #tpu.dot_dimension_numbers<[1], [0], [0], [1], [0, 0, 1, 1], [], []>} : vector<8x128xf32>, vector<128x32xf32>, vector<8x32xf32> -> vector<8x32xf32>
    %c0_30 = arith.constant 0 : index
    %c0_31 = arith.constant 0 : index
    %36 = vector.load %arg10[%c0_30, %c0_31] : memref<1x32xf32, #tpu.memory_space<vmem>>, vector<1x32xf32>
    %37 = vector.broadcast %36 : vector<1x32xf32> to vector<8x32xf32>
    %38 = arith.addf %35, %37 : vector<8x32xf32>
    %c0_32 = arith.constant 0 : index
    %c0_33 = arith.constant 0 : index
    %39 = vector.load %arg11[%c0_32, %c0_33] : memref<8x32xf32, #tpu.memory_space<vmem>>, vector<8x32xf32>
    tpu.vector_store %arg11[%c0_32, %c0_33], %38 {strides = array<i32>} : memref<8x32xf32, #tpu.memory_space<vmem>>, vector<8x32xf32>,
    return
  }
  func.func @transform_0(%arg0: i32) -> (i32, i32) {
    %c0_i32 = arith.constant 0 : i32
    %c0_i32_0 = arith.constant 0 : i32
    return %arg0, %c0_i32 : i32, i32
  }
  func.func @transform_1(%arg0: i32) -> (i32, i32) {
    %c0_i32 = arith.constant 0 : i32
    %c0_i32_0 = arith.constant 0 : i32
    return %arg0, %c0_i32 : i32, i32
  }
  func.func @transform_2(%arg0: i32) -> (i32, i32) {
    %c0_i32 = arith.constant 0 : i32
    %c0_i32_0 = arith.constant 0 : i32
    %c0_i32_1 = arith.constant 0 : i32
    return %c0_i32, %c0_i32_0 : i32, i32
  }
  func.func @transform_3(%arg0: i32) -> (i32, i32, i32) {
    %c0_i32 = arith.constant 0 : i32
    %c0_i32_0 = arith.constant 0 : i32
    %c0_i32_1 = arith.constant 0 : i32
    %c0_i32_2 = arith.constant 0 : i32
    return %c0_i32, %c0_i32_0, %c0_i32_1 : i32, i32, i32
  }
  func.func @transform_4(%arg0: i32) -> (i32, i32) {
    %c0_i32 = arith.constant 0 : i32
    %c0_i32_0 = arith.constant 0 : i32
    %c0_i32_1 = arith.constant 0 : i32
    return %c0_i32, %c0_i32_0 : i32, i32
  }
  func.func @transform_5(%arg0: i32) -> (i32, i32) {
    %c0_i32 = arith.constant 0 : i32
    %c0_i32_0 = arith.constant 0 : i32
    %c0_i32_1 = arith.constant 0 : i32
    return %c0_i32, %c0_i32_0 : i32, i32
  }
  func.func @transform_6(%arg0: i32) -> (i32, i32) {
    %c0_i32 = arith.constant 0 : i32
    %c0_i32_0 = arith.constant 0 : i32
    %c0_i32_1 = arith.constant 0 : i32
    return %c0_i32, %c0_i32_0 : i32, i32
  }
  func.func @transform_7(%arg0: i32) -> (i32, i32) {
    %c0_i32 = arith.constant 0 : i32
    %c0_i32_0 = arith.constant 0 : i32
    %c0_i32_1 = arith.constant 0 : i32
    return %c0_i32, %c0_i32_0 : i32, i32
  }
  func.func @transform_8(%arg0: i32) -> (i32, i32) {
    %c0_i32 = arith.constant 0 : i32
    %c0_i32_0 = arith.constant 0 : i32
    %c0_i32_1 = arith.constant 0 : i32
    return %c0_i32, %c0_i32_0 : i32, i32
  }
  func.func @transform_9(%arg0: i32) -> (i32, i32) {
    %c0_i32 = arith.constant 0 : i32
    %c0_i32_0 = arith.constant 0 : i32
    %c0_i32_1 = arith.constant 0 : i32
    return %c0_i32, %c0_i32_0 : i32, i32
  }
  func.func @transform_10(%arg0: i32) -> (i32, i32) {
    %c0_i32 = arith.constant 0 : i32
    %c0_i32_0 = arith.constant 0 : i32
    return %arg0, %c0_i32 : i32, i32
  }
}

</mosaic_0001>

<llo_original>
// kernel: tpu_custom_call.1
$region0: #{tpu_custom_call.1}
  #allocation0 [shape = 'u32[]', space=smem, size = 0x4, offset = 0x4, fixed_abs, tag = 'smem constant byte address 0x4 - core index']
  #allocation1 [shape = 'u32[144,128]{1,0:T(1,128)}', space=vmem, size = 0x12000, scoped, tag = 'internal scratch']
  %s0 = inlined_call_operand.vmem [shape: f32[8,32], index: 0, kind: input, shape index: {}]
  %s1 = inlined_call_operand.vmem [shape: f32[8,32], index: 1, kind: input, shape index: {}]
  %s2 = inlined_call_operand.vmem [shape: f32[32,128], index: 2, kind: input, shape index: {}]
  %s3 = inlined_call_operand.vmem [shape: f32[2,32,128], index: 3, kind: input, shape index: {}]
  %s4 = inlined_call_operand.vmem [shape: f32[3,128], index: 4, kind: input, shape index: {}]
  %s5 = inlined_call_operand.vmem [shape: f32[128,16], index: 5, kind: input, shape index: {}]
  %s6 = inlined_call_operand.vmem [shape: f32[16,16], index: 6, kind: input, shape index: {}]
  %s7 = inlined_call_operand.vmem [shape: f32[16,128], index: 7, kind: input, shape index: {}]
  %s8 = inlined_call_operand.vmem [shape: f32[128,32], index: 8, kind: input, shape index: {}]
  %s9 = inlined_call_operand.vmem [shape: f32[1,32], index: 9, kind: input, shape index: {}]
  %s10 = inlined_call_operand.hbm [shape: f32[8,32], index: 10, kind: output, shape index: {}]
  %s11 = sld [smem:[#allocation0]]
  $region50: #{tpu_custom_call.1} parent=0
    _
  %s13 = ssub.s32 1, %s11
  %s14 = scalar_select 0, %s13, %s11
  $region1: #{tpu_custom_call.1} parent=0
    #allocation2 [shape = 'u8[4096]{0}', space=vmem, size = 0x1000, scoped, tag = 'output window, operand 0, single buffered']
    #allocation3 [shape = 's32[1]{0}', space=sflag, size = 0x4, scoped, tag = 'scoped memory for tpu_custom_call.1']
    %15 = vsyncpa [#allocation3], 0
    // Predicated region
    $region2: #{tpu_custom_call.1} parent=1 // pred_check
      _
    $region3: #{tpu_custom_call.1} parent=1 // pred_check_branch
      %17 = sbr.rel (0) target = $region5
    $region4: #{tpu_custom_call.1} parent=1 // pred_region
      _
    $region5: #{tpu_custom_call.1} parent=1 // pred_fallthru
      _
    // Predicated region
    $region6: #{tpu_custom_call.1} parent=1 // pred_check
      _
    $region7: #{tpu_custom_call.1} parent=1 // pred_check_branch
      %19 = sbr.rel (0) target = $region9
    $region8: #{tpu_custom_call.1} parent=1 // pred_region
      _
    $region9: #{tpu_custom_call.1} parent=1 // pred_fallthru
      _
    // Predicated region
    $region10: #{tpu_custom_call.1} parent=1 // pred_check
      _
    $region11: #{tpu_custom_call.1} parent=1 // pred_check_branch
      %21 = sbr.rel (0) target = $region13
    $region12: #{tpu_custom_call.1} parent=1 // pred_region
      _
    $region13: #{tpu_custom_call.1} parent=1 // pred_fallthru
      _
    // Predicated region
    $region14: #{tpu_custom_call.1} parent=1 // pred_check
      _
    $region15: #{tpu_custom_call.1} parent=1 // pred_check_branch
      %23 = sbr.rel (0) target = $region17
    $region16: #{tpu_custom_call.1} parent=1 // pred_region
      _
    $region17: #{tpu_custom_call.1} parent=1 // pred_fallthru
      _
    // Predicated region
    $region18: #{tpu_custom_call.1} parent=1 // pred_check
      _
    $region19: #{tpu_custom_call.1} parent=1 // pred_check_branch
      %25 = sbr.rel (0) target = $region21
    $region20: #{tpu_custom_call.1} parent=1 // pred_region
      _
    $region21: #{tpu_custom_call.1} parent=1 // pred_fallthru
      _
    // Predicated region
    $region22: #{tpu_custom_call.1} parent=1 // pred_check
      _
    $region23: #{tpu_custom_call.1} parent=1 // pred_check_branch
      %27 = sbr.rel (0) target = $region25
    $region24: #{tpu_custom_call.1} parent=1 // pred_region
      _
    $region25: #{tpu_custom_call.1} parent=1 // pred_fallthru
      _
    // Predicated region
    $region26: #{tpu_custom_call.1} parent=1 // pred_check
      _
    $region27: #{tpu_custom_call.1} parent=1 // pred_check_branch
      %29 = sbr.rel (0) target = $region29
    $region28: #{tpu_custom_call.1} parent=1 // pred_region
      _
    $region29: #{tpu_custom_call.1} parent=1 // pred_fallthru
      _
    // Predicated region
    $region30: #{tpu_custom_call.1} parent=1 // pred_check
      _
    $region31: #{tpu_custom_call.1} parent=1 // pred_check_branch
      %31 = sbr.rel (0) target = $region33
    $region32: #{tpu_custom_call.1} parent=1 // pred_region
      _
    $region33: #{tpu_custom_call.1} parent=1 // pred_fallthru
      _
    // Predicated region
    $region34: #{tpu_custom_call.1} parent=1 // pred_check
      _
    $region35: #{tpu_custom_call.1} parent=1 // pred_check_branch
      %33 = sbr.rel (0) target = $region37
    $region36: #{tpu_custom_call.1} parent=1 // pred_region
      _
    $region37: #{tpu_custom_call.1} parent=1 // pred_fallthru
      _
    // Predicated region
    $region38: #{tpu_custom_call.1} parent=1 // pred_check
      _
    $region39: #{tpu_custom_call.1} parent=1 // pred_check_branch
      %35 = sbr.rel (0) target = $region41
    $region40: #{tpu_custom_call.1} parent=1 // pred_region
      _
    $region41: #{tpu_custom_call.1} parent=1 // pred_fallthru
      _
    %v36 = vld [vmem:[%s0] sm:$0xff]
    %v37 = vld [vmem:[%s1] sm:$0xff]
    %v38 = vld [vmem:[%s2] sm:$0xff]
    %v39 = vld [vmem:[%s2 + $0x8] sm:$0xff]
    %v40 = vld [vmem:[%s2 + $0x10] sm:$0xff]
    %v41 = vld [vmem:[%s2 + $0x18] sm:$0xff]
    %v42 = vld [vmem:[%s4] sm:$0x1]
    %v43 = vlaneseq
    %v44 = vshrl.u32 %v43, 7
    %v45 = vsub.s32 0, %v44
    %v46 = vrot.slane %v42, %v45
    %vm47 = vcmask 261120
    %v49 = vsel %vm47, %v36, 0
    %51 = vmatprep.subr.mxu0 0.0
    %52 = vmatpush1.msra.mxu0 0.0
    %53 = vmatprep.subr.mxu0 0.0
    %54 = vmatpush1.msra.mxu0 0.0
    %55 = vmatprep.subr.mxu0 0.0
    %56 = vmatpush1.msra.mxu0 0.0
    %57 = vmatprep.subr.mxu0 0.0
    %58 = vmatpush1.msra.mxu0 0.0
    %59 = vmatprep.subr.mxu0 0.0
    %60 = vmatpush1.msra.mxu0 0.0
    %61 = vmatprep.subr.mxu0 0.0
    %62 = vmatpush1.msra.mxu0 0.0
    %63 = vmatprep.subr.mxu0 0.0
    %64 = vmatpush1.msra.mxu0 0.0
    %65 = vmatprep.subr.mxu0 0.0
    %66 = vmatpush1.msra.mxu0 0.0
    %67 = vmatprep.subr.mxu0 0.0
    %68 = vmatpush1.msra.mxu0 0.0
    %69 = vmatprep.subr.mxu0 0.0
    %70 = vmatpush1.msra.mxu0 0.0
    %71 = vmatprep.subr.mxu0 0.0
    %72 = vmatpush1.msra.mxu0 0.0
    %73 = vmatprep.subr.mxu0 0.0
    %74 = vmatpush1.msra.mxu0 0.0
    %75 = vmatprep.subr.mxu0 0.0
    %76 = vmatpush1.msra.mxu0 %v41
    %77 = vmatprep.subr.mxu0 0.0
    %78 = vmatpush1.msra.mxu0 %v40
    %79 = vmatprep.subr.mxu0 0.0
    %80 = vmatpush1.msra.mxu0 %v39
    %81 = vmatprep.subr.mxu0 0.0
    %82 = vmatpush1.msra.mxu0 %v38
    %83 = vmatprep.subr.mxu0 0.0
    %84 = vmatpush2.msra.mxu0 0.0
    %85 = vmatprep.subr.mxu0 0.0
    %86 = vmatpush2.msra.mxu0 0.0
    %87 = vmatprep.subr.mxu0 0.0
    %88 = vmatpush2.msra.mxu0 0.0
    %89 = vmatprep.subr.mxu0 0.0
    %90 = vmatpush2.msra.mxu0 0.0
    %91 = vmatprep.subr.mxu0 0.0
    %92 = vmatpush2.msra.mxu0 0.0
    %93 = vmatprep.subr.mxu0 0.0
    %94 = vmatpush2.msra.mxu0 0.0
    %95 = vmatprep.subr.mxu0 0.0
    %96 = vmatpush2.msra.mxu0 0.0
    %97 = vmatprep.subr.mxu0 0.0
    %98 = vmatpush2.msra.mxu0 0.0
    %99 = vmatprep.subr.mxu0 0.0
    %100 = vmatpush2.msra.mxu0 0.0
    %101 = vmatprep.subr.mxu0 0.0
    %102 = vmatpush2.msra.mxu0 0.0
    %103 = vmatprep.subr.mxu0 0.0
    %104 = vmatpush2.msra.mxu0 0.0
    %105 = vmatprep.subr.mxu0 0.0
    %106 = vmatpush2.msra.mxu0 0.0
    %107 = vmatprep.subr.mxu0 0.0
    %108 = vmatpush2.msra.mxu0 0.0
    %109 = vmatprep.subr.mxu0 0.0
    %110 = vmatpush2.msra.mxu0 0.0
    %111 = vmatprep.subr.mxu0 0.0
    %112 = vmatpush2.msra.mxu0 0.0
    %113 = vmatprep.subr.mxu0 0.0
    %114 = vmatpush2.msra.mxu0 0.0
    %115 = vmatprep.mubr.f32.mxu0 0.0
    %116 = vmatmul.mubr.f32.gmra.mxu0 %v49
    %v117 = vpop.f32.mrf.mxu0
    %v118 = vadd.f32 %v46, %v117
    %v119 = vpop.f32.mrf.mxu0
    %120 = vdwg.mxu0
    %v121 = vld [vmem:[%s3] sm:$0xff]
    %v122 = vld [vmem:[%s3 + $0x8] sm:$0xff]
    %v123 = vld [vmem:[%s3 + $0x10] sm:$0xff]
    %v124 = vld [vmem:[%s3 + $0x18] sm:$0xff]
    %v125 = vld [vmem:[%s4 + $0x1] sm:$0x1]
    %v126 = vlaneseq
    %v127 = vshrl.u32 %v126, 7
    %v128 = vsub.s32 0, %v127
    %v129 = vrot.slane %v125, %v128
    %v131 = vsel %vm47, %v37, 0
    %133 = vmatprep.subr.mxu0 0.0
    %134 = vmatpush1.msra.mxu0 0.0
    %135 = vmatprep.subr.mxu0 0.0
    %136 = vmatpush1.msra.mxu0 0.0
    %137 = vmatprep.subr.mxu0 0.0
    %138 = vmatpush1.msra.mxu0 0.0
    %139 = vmatprep.subr.mxu0 0.0
    %140 = vmatpush1.msra.mxu0 0.0
    %141 = vmatprep.subr.mxu0 0.0
    %142 = vmatpush1.msra.mxu0 0.0
    %143 = vmatprep.subr.mxu0 0.0
    %144 = vmatpush1.msra.mxu0 0.0
    %145 = vmatprep.subr.mxu0 0.0
    %146 = vmatpush1.msra.mxu0 0.0
    %147 = vmatprep.subr.mxu0 0.0
    %148 = vmatpush1.msra.mxu0 0.0
    %149 = vmatprep.subr.mxu0 0.0
    %150 = vmatpush1.msra.mxu0 0.0
    %151 = vmatprep.subr.mxu0 0.0
    %152 = vmatpush1.msra.mxu0 0.0
    %153 = vmatprep.subr.mxu0 0.0
    %154 = vmatpush1.msra.mxu0 0.0
    %155 = vmatprep.subr.mxu0 0.0
    %156 = vmatpush1.msra.mxu0 0.0
    %157 = vmatprep.subr.mxu0 0.0
    %158 = vmatpush1.msra.mxu0 %v124
    %159 = vmatprep.subr.mxu0 0.0
    %160 = vmatpush1.msra.mxu0 %v123
    %161 = vmatprep.subr.mxu0 0.0
    %162 = vmatpush1.msra.mxu0 %v122
    %163 = vmatprep.subr.mxu0 0.0
    %164 = vmatpush1.msra.mxu0 %v121
    %165 = vmatprep.subr.mxu0 0.0
    %166 = vmatpush2.msra.mxu0 0.0
    %167 = vmatprep.subr.mxu0 0.0
    %168 = vmatpush2.msra.mxu0 0.0
    %169 = vmatprep.subr.mxu0 0.0
    %170 = vmatpush2.msra.mxu0 0.0
    %171 = vmatprep.subr.mxu0 0.0
    %172 = vmatpush2.msra.mxu0 0.0
    %173 = vmatprep.subr.mxu0 0.0
    %174 = vmatpush2.msra.mxu0 0.0
    %175 = vmatprep.subr.mxu0 0.0
    %176 = vmatpush2.msra.mxu0 0.0
    %177 = vmatprep.subr.mxu0 0.0
    %178 = vmatpush2.msra.mxu0 0.0
    %179 = vmatprep.subr.mxu0 0.0
    %180 = vmatpush2.msra.mxu0 0.0
    %181 = vmatprep.subr.mxu0 0.0
    %182 = vmatpush2.msra.mxu0 0.0
    %183 = vmatprep.subr.mxu0 0.0
    %184 = vmatpush2.msra.mxu0 0.0
    %185 = vmatprep.subr.mxu0 0.0
    %186 = vmatpush2.msra.mxu0 0.0
    %187 = vmatprep.subr.mxu0 0.0
    %188 = vmatpush2.msra.mxu0 0.0
    %189 = vmatprep.subr.mxu0 0.0
    %190 = vmatpush2.msra.mxu0 0.0
    %191 = vmatprep.subr.mxu0 0.0
    %192 = vmatpush2.msra.mxu0 0.0
    %193 = vmatprep.subr.mxu0 0.0
    %194 = vmatpush2.msra.mxu0 0.0
    %195 = vmatprep.subr.mxu0 0.0
    %196 = vmatpush2.msra.mxu0 0.0
    %197 = vmatprep.mubr.f32.mxu0 0.0
    %198 = vmatmul.mubr.f32.gmra.mxu0 %v131
    %v199 = vpop.f32.mrf.mxu0
    %v200 = vadd.f32 %v129, %v199
    %v201 = vpop.f32.mrf.mxu0
    %202 = vdwg.mxu0
    %s203 = scalar_lea.vmem %s3, 32
    %v204 = vld [vmem:[%s203] sm:$0xff]
    %v205 = vld [vmem:[%s203 + $0x8] sm:$0xff]
    %v206 = vld [vmem:[%s203 + $0x10] sm:$0xff]
    %v207 = vld [vmem:[%s203 + $0x18] sm:$0xff]
    %v208 = vld [vmem:[%s4 + $0x2] sm:$0x1]
    %v209 = vlaneseq
    %v210 = vshrl.u32 %v209, 7
    %v211 = vsub.s32 0, %v210
    %v212 = vrot.slane %v208, %v211
    %213 = vmatprep.subr.mxu0 0.0
    %214 = vmatpush1.msra.mxu0 0.0
    %215 = vmatprep.subr.mxu0 0.0
    %216 = vmatpush1.msra.mxu0 0.0
    %217 = vmatprep.subr.mxu0 0.0
    %218 = vmatpush1.msra.mxu0 0.0
    %219 = vmatprep.subr.mxu0 0.0
    %220 = vmatpush1.msra.mxu0 0.0
    %221 = vmatprep.subr.mxu0 0.0
    %222 = vmatpush1.msra.mxu0 0.0
    %223 = vmatprep.subr.mxu0 0.0
    %224 = vmatpush1.msra.mxu0 0.0
    %225 = vmatprep.subr.mxu0 0.0
    %226 = vmatpush1.msra.mxu0 0.0
    %227 = vmatprep.subr.mxu0 0.0
    %228 = vmatpush1.msra.mxu0 0.0
    %229 = vmatprep.subr.mxu0 0.0
    %230 = vmatpush1.msra.mxu0 0.0
    %231 = vmatprep.subr.mxu0 0.0
    %232 = vmatpush1.msra.mxu0 0.0
    %233 = vmatprep.subr.mxu0 0.0
    %234 = vmatpush1.msra.mxu0 0.0
    %235 = vmatprep.subr.mxu0 0.0
    %236 = vmatpush1.msra.mxu0 0.0
    %237 = vmatprep.subr.mxu0 0.0
    %238 = vmatpush1.msra.mxu0 %v207
    %239 = vmatprep.subr.mxu0 0.0
    %240 = vmatpush1.msra.mxu0 %v206
    %241 = vmatprep.subr.mxu0 0.0
    %242 = vmatpush1.msra.mxu0 %v205
    %243 = vmatprep.subr.mxu0 0.0
    %244 = vmatpush1.msra.mxu0 %v204
    %245 = vmatprep.subr.mxu0 0.0
    %246 = vmatpush2.msra.mxu0 0.0
    %247 = vmatprep.subr.mxu0 0.0
    %248 = vmatpush2.msra.mxu0 0.0
    %249 = vmatprep.subr.mxu0 0.0
    %250 = vmatpush2.msra.mxu0 0.0
    %251 = vmatprep.subr.mxu0 0.0
    %252 = vmatpush2.msra.mxu0 0.0
    %253 = vmatprep.subr.mxu0 0.0
    %254 = vmatpush2.msra.mxu0 0.0
    %255 = vmatprep.subr.mxu0 0.0
    %256 = vmatpush2.msra.mxu0 0.0
    %257 = vmatprep.subr.mxu0 0.0
    %258 = vmatpush2.msra.mxu0 0.0
    %259 = vmatprep.subr.mxu0 0.0
    %260 = vmatpush2.msra.mxu0 0.0
    %261 = vmatprep.subr.mxu0 0.0
    %262 = vmatpush2.msra.mxu0 0.0
    %263 = vmatprep.subr.mxu0 0.0
    %264 = vmatpush2.msra.mxu0 0.0
    %265 = vmatprep.subr.mxu0 0.0
    %266 = vmatpush2.msra.mxu0 0.0
    %267 = vmatprep.subr.mxu0 0.0
    %268 = vmatpush2.msra.mxu0 0.0
    %269 = vmatprep.subr.mxu0 0.0
    %270 = vmatpush2.msra.mxu0 0.0
    %271 = vmatprep.subr.mxu0 0.0
    %272 = vmatpush2.msra.mxu0 0.0
    %273 = vmatprep.subr.mxu0 0.0
    %274 = vmatpush2.msra.mxu0 0.0
    %275 = vmatprep.subr.mxu0 0.0
    %276 = vmatpush2.msra.mxu0 0.0
    %277 = vmatprep.mubr.f32.mxu0 0.0
    %278 = vmatmul.mubr.f32.gmra.mxu0 %v131
    %v279 = vpop.f32.mrf.mxu0
    %v280 = vadd.f32 %v212, %v279
    %v281 = vpop.f32.mrf.mxu0
    %282 = vdwg.mxu0
    %v283 = vmul.f32 %v118, %v200
    %v284 = vld [vmem:[%s5] sm:$0xff]
    %v285 = vld [vmem:[%s5 + $0x8] sm:$0xff]
    %v286 = vld [vmem:[%s5 + $0x10] sm:$0xff]
    %v287 = vld [vmem:[%s5 + $0x18] sm:$0xff]
    %v288 = vld [vmem:[%s5 + $0x20] sm:$0xff]
    %v289 = vld [vmem:[%s5 + $0x28] sm:$0xff]
    %v290 = vld [vmem:[%s5 + $0x30] sm:$0xff]
    %v291 = vld [vmem:[%s5 + $0x38] sm:$0xff]
    %v292 = vld [vmem:[%s5 + $0x40] sm:$0xff]
    %v293 = vld [vmem:[%s5 + $0x48] sm:$0xff]
    %v294 = vld [vmem:[%s5 + $0x50] sm:$0xff]
    %v295 = vld [vmem:[%s5 + $0x58] sm:$0xff]
    %v296 = vld [vmem:[%s5 + $0x60] sm:$0xff]
    %v297 = vld [vmem:[%s5 + $0x68] sm:$0xff]
    %v298 = vld [vmem:[%s5 + $0x70] sm:$0xff]
    %v299 = vld [vmem:[%s5 + $0x78] sm:$0xff]
    %300 = vmatprep.subr.mxu0 0.0
    %301 = vmatpush1.msra.mxu0 %v299
    %302 = vmatprep.subr.mxu0 0.0
    %303 = vmatpush1.msra.mxu0 %v298
    %304 = vmatprep.subr.mxu0 0.0
    %305 = vmatpush1.msra.mxu0 %v297
    %306 = vmatprep.subr.mxu0 0.0
    %307 = vmatpush1.msra.mxu0 %v296
    %308 = vmatprep.subr.mxu0 0.0
    %309 = vmatpush1.msra.mxu0 %v295
    %310 = vmatprep.subr.mxu0 0.0
    %311 = vmatpush1.msra.mxu0 %v294
    %312 = vmatprep.subr.mxu0 0.0
    %313 = vmatpush1.msra.mxu0 %v293
    %314 = vmatprep.subr.mxu0 0.0
    %315 = vmatpush1.msra.mxu0 %v292
    %316 = vmatprep.subr.mxu0 0.0
    %317 = vmatpush1.msra.mxu0 %v291
    %318 = vmatprep.subr.mxu0 0.0
    %319 = vmatpush1.msra.mxu0 %v290
    %320 = vmatprep.subr.mxu0 0.0
    %321 = vmatpush1.msra.mxu0 %v289
    %322 = vmatprep.subr.mxu0 0.0
    %323 = vmatpush1.msra.mxu0 %v288
    %324 = vmatprep.subr.mxu0 0.0
    %325 = vmatpush1.msra.mxu0 %v287
    %326 = vmatprep.subr.mxu0 0.0
    %327 = vmatpush1.msra.mxu0 %v286
    %328 = vmatprep.subr.mxu0 0.0
    %329 = vmatpush1.msra.mxu0 %v285
    %330 = vmatprep.subr.mxu0 0.0
    %331 = vmatpush1.msra.mxu0 %v284
    %332 = vmatprep.subr.mxu0 0.0
    %333 = vmatpush2.msra.mxu0 0.0
    %334 = vmatprep.subr.mxu0 0.0
    %335 = vmatpush2.msra.mxu0 0.0
    %336 = vmatprep.subr.mxu0 0.0
    %337 = vmatpush2.msra.mxu0 0.0
    %338 = vmatprep.subr.mxu0 0.0
    %339 = vmatpush2.msra.mxu0 0.0
    %340 = vmatprep.subr.mxu0 0.0
    %341 = vmatpush2.msra.mxu0 0.0
    %342 = vmatprep.subr.mxu0 0.0
    %343 = vmatpush2.msra.mxu0 0.0
    %344 = vmatprep.subr.mxu0 0.0
    %345 = vmatpush2.msra.mxu0 0.0
    %346 = vmatprep.subr.mxu0 0.0
    %347 = vmatpush2.msra.mxu0 0.0
    %348 = vmatprep.subr.mxu0 0.0
    %349 = vmatpush2.msra.mxu0 0.0
    %350 = vmatprep.subr.mxu0 0.0
    %351 = vmatpush2.msra.mxu0 0.0
    %352 = vmatprep.subr.mxu0 0.0
    %353 = vmatpush2.msra.mxu0 0.0
    %354 = vmatprep.subr.mxu0 0.0
    %355 = vmatpush2.msra.mxu0 0.0
    %356 = vmatprep.subr.mxu0 0.0
    %357 = vmatpush2.msra.mxu0 0.0
    %358 = vmatprep.subr.mxu0 0.0
    %359 = vmatpush2.msra.mxu0 0.0
    %360 = vmatprep.subr.mxu0 0.0
    %361 = vmatpush2.msra.mxu0 0.0
    %362 = vmatprep.subr.mxu0 0.0
    %363 = vmatpush2.msra.mxu0 0.0
    %364 = vmatprep.mubr.f32.mxu0 0.0
    %365 = vmatmul.mubr.f32.gmra.mxu0 %v283
    %v366 = vpop.f32.mrf.mxu0
    %v367 = vadd.f32 0.0, %v366
    %v368 = vpop.f32.mrf.mxu0
    %369 = vdwg.mxu0
    %vm370 = vcmask 130048
    %v371 = vsel %vm370, %v367, -inf
    %372 = vmax.xlane.f32.xlu0 %v371
    %v373 = vpop.xlane.xlu0 %372
    %v374 = vsub.f32 %v367, %v373
    %v375 = vmul.f32 %v374, 1.442695
    %v376 = vpow.pop %v375
    %v377 = vld [vmem:[%s6] sm:$0xff]
    %v378 = vld [vmem:[%s6 + $0x8] sm:$0xff]
    %v380 = vsel %vm370, %v376, 0
    %382 = vmatprep.subr.mxu0 0.0
    %383 = vmatpush1.msra.mxu0 0.0
    %384 = vmatprep.subr.mxu0 0.0
    %385 = vmatpush1.msra.mxu0 0.0
    %386 = vmatprep.subr.mxu0 0.0
    %387 = vmatpush1.msra.mxu0 0.0
    %388 = vmatprep.subr.mxu0 0.0
    %389 = vmatpush1.msra.mxu0 0.0
    %390 = vmatprep.subr.mxu0 0.0
    %391 = vmatpush1.msra.mxu0 0.0
    %392 = vmatprep.subr.mxu0 0.0
    %393 = vmatpush1.msra.mxu0 0.0
    %394 = vmatprep.subr.mxu0 0.0
    %395 = vmatpush1.msra.mxu0 0.0
    %396 = vmatprep.subr.mxu0 0.0
    %397 = vmatpush1.msra.mxu0 0.0
    %398 = vmatprep.subr.mxu0 0.0
    %399 = vmatpush1.msra.mxu0 0.0
    %400 = vmatprep.subr.mxu0 0.0
    %401 = vmatpush1.msra.mxu0 0.0
    %402 = vmatprep.subr.mxu0 0.0
    %403 = vmatpush1.msra.mxu0 0.0
    %404 = vmatprep.subr.mxu0 0.0
    %405 = vmatpush1.msra.mxu0 0.0
    %406 = vmatprep.subr.mxu0 0.0
    %407 = vmatpush1.msra.mxu0 0.0
    %408 = vmatprep.subr.mxu0 0.0
    %409 = vmatpush1.msra.mxu0 0.0
    %410 = vmatprep.subr.mxu0 0.0
    %411 = vmatpush1.msra.mxu0 %v378
    %412 = vmatprep.subr.mxu0 0.0
    %413 = vmatpush1.msra.mxu0 %v377
    %414 = vmatprep.subr.mxu0 0.0
    %415 = vmatpush2.msra.mxu0 0.0
    %416 = vmatprep.subr.mxu0 0.0
    %417 = vmatpush2.msra.mxu0 0.0
    %418 = vmatprep.subr.mxu0 0.0
    %419 = vmatpush2.msra.mxu0 0.0
    %420 = vmatprep.subr.mxu0 0.0
    %421 = vmatpush2.msra.mxu0 0.0
    %422 = vmatprep.subr.mxu0 0.0
    %423 = vmatpush2.msra.mxu0 0.0
    %424 = vmatprep.subr.mxu0 0.0
    %425 = vmatpush2.msra.mxu0 0.0
    %426 = vmatprep.subr.mxu0 0.0
    %427 = vmatpush2.msra.mxu0 0.0
    %428 = vmatprep.subr.mxu0 0.0
    %429 = vmatpush2.msra.mxu0 0.0
    %430 = vmatprep.subr.mxu0 0.0
    %431 = vmatpush2.msra.mxu0 0.0
    %432 = vmatprep.subr.mxu0 0.0
    %433 = vmatpush2.msra.mxu0 0.0
    %434 = vmatprep.subr.mxu0 0.0
    %435 = vmatpush2.msra.mxu0 0.0
    %436 = vmatprep.subr.mxu0 0.0
    %437 = vmatpush2.msra.mxu0 0.0
    %438 = vmatprep.subr.mxu0 0.0
    %439 = vmatpush2.msra.mxu0 0.0
    %440 = vmatprep.subr.mxu0 0.0
    %441 = vmatpush2.msra.mxu0 0.0
    %442 = vmatprep.subr.mxu0 0.0
    %443 = vmatpush2.msra.mxu0 0.0
    %444 = vmatprep.subr.mxu0 0.0
    %445 = vmatpush2.msra.mxu0 0.0
    %446 = vmatprep.mubr.f32.mxu0 0.0
    %447 = vmatmul.mubr.f32.gmra.mxu0 %v380
    %v448 = vpop.f32.mrf.mxu0
    %v449 = vadd.f32 0.0, %v448
    %v450 = vpop.f32.mrf.mxu0
    %451 = vdwg.mxu0
    %v452 = vrcp.pop %v449
    %v453 = vmul.f32 %v376, %v452
    %v454 = vld [vmem:[%s7] sm:$0xff]
    %v455 = vld [vmem:[%s7 + $0x8] sm:$0xff]
    %v457 = vsel %vm370, %v453, 0
    %459 = vmatprep.subr.mxu0 0.0
    %460 = vmatpush1.msra.mxu0 0.0
    %461 = vmatprep.subr.mxu0 0.0
    %462 = vmatpush1.msra.mxu0 0.0
    %463 = vmatprep.subr.mxu0 0.0
    %464 = vmatpush1.msra.mxu0 0.0
    %465 = vmatprep.subr.mxu0 0.0
    %466 = vmatpush1.msra.mxu0 0.0
    %467 = vmatprep.subr.mxu0 0.0
    %468 = vmatpush1.msra.mxu0 0.0
    %469 = vmatprep.subr.mxu0 0.0
    %470 = vmatpush1.msra.mxu0 0.0
    %471 = vmatprep.subr.mxu0 0.0
    %472 = vmatpush1.msra.mxu0 0.0
    %473 = vmatprep.subr.mxu0 0.0
    %474 = vmatpush1.msra.mxu0 0.0
    %475 = vmatprep.subr.mxu0 0.0
    %476 = vmatpush1.msra.mxu0 0.0
    %477 = vmatprep.subr.mxu0 0.0
    %478 = vmatpush1.msra.mxu0 0.0
    %479 = vmatprep.subr.mxu0 0.0
    %480 = vmatpush1.msra.mxu0 0.0
    %481 = vmatprep.subr.mxu0 0.0
    %482 = vmatpush1.msra.mxu0 0.0
    %483 = vmatprep.subr.mxu0 0.0
    %484 = vmatpush1.msra.mxu0 0.0
    %485 = vmatprep.subr.mxu0 0.0
    %486 = vmatpush1.msra.mxu0 0.0
    %487 = vmatprep.subr.mxu0 0.0
    %488 = vmatpush1.msra.mxu0 %v455
    %489 = vmatprep.subr.mxu0 0.0
    %490 = vmatpush1.msra.mxu0 %v454
    %491 = vmatprep.subr.mxu0 0.0
    %492 = vmatpush2.msra.mxu0 0.0
    %493 = vmatprep.subr.mxu0 0.0
    %494 = vmatpush2.msra.mxu0 0.0
    %495 = vmatprep.subr.mxu0 0.0
    %496 = vmatpush2.msra.mxu0 0.0
    %497 = vmatprep.subr.mxu0 0.0
    %498 = vmatpush2.msra.mxu0 0.0
    %499 = vmatprep.subr.mxu0 0.0
    %500 = vmatpush2.msra.mxu0 0.0
    %501 = vmatprep.subr.mxu0 0.0
    %502 = vmatpush2.msra.mxu0 0.0
    %503 = vmatprep.subr.mxu0 0.0
    %504 = vmatpush2.msra.mxu0 0.0
    %505 = vmatprep.subr.mxu0 0.0
    %506 = vmatpush2.msra.mxu0 0.0
    %507 = vmatprep.subr.mxu0 0.0
    %508 = vmatpush2.msra.mxu0 0.0
    %509 = vmatprep.subr.mxu0 0.0
    %510 = vmatpush2.msra.mxu0 0.0
    %511 = vmatprep.subr.mxu0 0.0
    %512 = vmatpush2.msra.mxu0 0.0
    %513 = vmatprep.subr.mxu0 0.0
    %514 = vmatpush2.msra.mxu0 0.0
    %515 = vmatprep.subr.mxu0 0.0
    %516 = vmatpush2.msra.mxu0 0.0
    %517 = vmatprep.subr.mxu0 0.0
    %518 = vmatpush2.msra.mxu0 0.0
    %519 = vmatprep.subr.mxu0 0.0
    %520 = vmatpush2.msra.mxu0 0.0
    %521 = vmatprep.subr.mxu0 0.0
    %522 = vmatpush2.msra.mxu0 0.0
    %523 = vmatprep.mubr.f32.mxu0 0.0
    %524 = vmatmul.mubr.f32.gmra.mxu0 %v457
    %v525 = vpop.f32.mrf.mxu0
    %v526 = vadd.f32 0.0, %v525
    %v527 = vpop.f32.mrf.mxu0
    %528 = vdwg.mxu0
    %v529 = vmul.f32 %v526, %v280
    %v530 = vld [vmem:[%s8] sm:$0xff]
    %v531 = vld [vmem:[%s8 + $0x8] sm:$0xff]
    %v532 = vld [vmem:[%s8 + $0x10] sm:$0xff]
    %v533 = vld [vmem:[%s8 + $0x18] sm:$0xff]
    %v534 = vld [vmem:[%s8 + $0x20] sm:$0xff]
    %v535 = vld [vmem:[%s8 + $0x28] sm:$0xff]
    %v536 = vld [vmem:[%s8 + $0x30] sm:$0xff]
    %v537 = vld [vmem:[%s8 + $0x38] sm:$0xff]
    %v538 = vld [vmem:[%s8 + $0x40] sm:$0xff]
    %v539 = vld [vmem:[%s8 + $0x48] sm:$0xff]
    %v540 = vld [vmem:[%s8 + $0x50] sm:$0xff]
    %v541 = vld [vmem:[%s8 + $0x58] sm:$0xff]
    %v542 = vld [vmem:[%s8 + $0x60] sm:$0xff]
    %v543 = vld [vmem:[%s8 + $0x68] sm:$0xff]
    %v544 = vld [vmem:[%s8 + $0x70] sm:$0xff]
    %v545 = vld [vmem:[%s8 + $0x78] sm:$0xff]
    %v546 = vld [vmem:[%s9] sm:$0x1]
    %v548 = vlaneseq
    %v549 = vshrl.u32 %v548, 7
    %v550 = vsub.s32 0, %v549
    %v551 = vrot.slane %v546, %v550
    %553 = vmatprep.subr.mxu0 0.0
    %554 = vmatpush1.msra.mxu0 %v545
    %555 = vmatprep.subr.mxu0 0.0
    %556 = vmatpush1.msra.mxu0 %v544
    %557 = vmatprep.subr.mxu0 0.0
    %558 = vmatpush1.msra.mxu0 %v543
    %559 = vmatprep.subr.mxu0 0.0
    %560 = vmatpush1.msra.mxu0 %v542
    %561 = vmatprep.subr.mxu0 0.0
    %562 = vmatpush1.msra.mxu0 %v541
    %563 = vmatprep.subr.mxu0 0.0
    %564 = vmatpush1.msra.mxu0 %v540
    %565 = vmatprep.subr.mxu0 0.0
    %566 = vmatpush1.msra.mxu0 %v539
    %567 = vmatprep.subr.mxu0 0.0
    %568 = vmatpush1.msra.mxu0 %v538
    %569 = vmatprep.subr.mxu0 0.0
    %570 = vmatpush1.msra.mxu0 %v537
    %571 = vmatprep.subr.mxu0 0.0
    %572 = vmatpush1.msra.mxu0 %v536
    %573 = vmatprep.subr.mxu0 0.0
    %574 = vmatpush1.msra.mxu0 %v535
    %575 = vmatprep.subr.mxu0 0.0
    %576 = vmatpush1.msra.mxu0 %v534
    %577 = vmatprep.subr.mxu0 0.0
    %578 = vmatpush1.msra.mxu0 %v533
    %579 = vmatprep.subr.mxu0 0.0
    %580 = vmatpush1.msra.mxu0 %v532
    %581 = vmatprep.subr.mxu0 0.0
    %582 = vmatpush1.msra.mxu0 %v531
    %583 = vmatprep.subr.mxu0 0.0
    %584 = vmatpush1.msra.mxu0 %v530
    %585 = vmatprep.subr.mxu0 0.0
    %586 = vmatpush2.msra.mxu0 0.0
    %587 = vmatprep.subr.mxu0 0.0
    %588 = vmatpush2.msra.mxu0 0.0
    %589 = vmatprep.subr.mxu0 0.0
    %590 = vmatpush2.msra.mxu0 0.0
    %591 = vmatprep.subr.mxu0 0.0
    %592 = vmatpush2.msra.mxu0 0.0
    %593 = vmatprep.subr.mxu0 0.0
    %594 = vmatpush2.msra.mxu0 0.0
    %595 = vmatprep.subr.mxu0 0.0
    %596 = vmatpush2.msra.mxu0 0.0
    %597 = vmatprep.subr.mxu0 0.0
    %598 = vmatpush2.msra.mxu0 0.0
    %599 = vmatprep.subr.mxu0 0.0
    %600 = vmatpush2.msra.mxu0 0.0
    %601 = vmatprep.subr.mxu0 0.0
    %602 = vmatpush2.msra.mxu0 0.0
    %603 = vmatprep.subr.mxu0 0.0
    %604 = vmatpush2.msra.mxu0 0.0
    %605 = vmatprep.subr.mxu0 0.0
    %606 = vmatpush2.msra.mxu0 0.0
    %607 = vmatprep.subr.mxu0 0.0
    %608 = vmatpush2.msra.mxu0 0.0
    %609 = vmatprep.subr.mxu0 0.0
    %610 = vmatpush2.msra.mxu0 0.0
    %611 = vmatprep.subr.mxu0 0.0
    %612 = vmatpush2.msra.mxu0 0.0
    %613 = vmatprep.subr.mxu0 0.0
    %614 = vmatpush2.msra.mxu0 0.0
    %615 = vmatprep.subr.mxu0 0.0
    %616 = vmatpush2.msra.mxu0 0.0
    %617 = vmatprep.mubr.f32.mxu0 0.0
    %618 = vmatmul.mubr.f32.gmra.mxu0 %v529
    %v619 = vpop.f32.mrf.mxu0
    %v620 = vadd.f32 %v551, %v619
    %v621 = vpop.f32.mrf.mxu0
    %622 = vdwg.mxu0
    %623 = vst.msk [vmem:[#allocation2] sm:$0xff] %vm47, %v620
    // Predicated region
    $region42: #{tpu_custom_call.1} parent=1 // pred_check
      _
    $region43: #{tpu_custom_call.1} parent=1 // pred_check_branch
      %625 = sbr.rel (0) target = $region45
    $region44: #{tpu_custom_call.1} parent=1 // pred_region
      %s627 = ssub.s32 128, 128
      %628 = vsyncadd [#allocation3], %s627
      %s630 = sshll.u32 [#allocation2], 4
      %s631 = int_to_ptr.vmem [resolvable:$true] %s630
      %633 = dma.vmem_to_hbm [thread:$0]  %s631, 128, %s10, [#allocation3]
    $region45: #{tpu_custom_call.1} parent=1 // pred_fallthru
      _
    // Predicated region
    $region46: #{tpu_custom_call.1} parent=1 // pred_check
      _
    $region47: #{tpu_custom_call.1} parent=1 // pred_check_branch
      %635 = sbr.rel (0) target = $region49
    $region48: #{tpu_custom_call.1} parent=1 // pred_region
      %636 = dma.done [#allocation3], 128
    $region49: #{tpu_custom_call.1} parent=1 // pred_fallthru
      _
    %637 = vsyncpa [#allocation3], 1

</llo_original>
